<compile_context>
chip_gen: v6e
topology: v6e:2x2x1
jax: 0.10.0
libtpu: 0.0.40
codegen_flags: <defaults>
</compile_context>

<pallas_src>
import jax
import jax.numpy as jnp
from jax.experimental import pallas as pl
from jax.experimental.pallas import tpu as pltpu


def _normalize_kernel(x_ref, sd_ref, o_ref):
    # x_ref:  (tr, tl) tile of the flattened input
    # sd_ref: (tr, 2)  per-row [scale, dist]; columns broadcast across lanes
    sd = sd_ref[...]
    scale = sd[:, 0:1]          # (tr, 1)
    dist = sd[:, 1:2]           # (tr, 1)
    o_ref[...] = (x_ref[...] * scale - dist).astype(o_ref.dtype)


def _round_up(x, m):
    return ((x + m - 1) // m) * m


def normalize_pallas(x_nchw, dist, scale, *, lane_tile=1024, row_tile=512,
                     vmem_budget_bytes=12 * 1024 * 1024):
    """x_nchw: (N, 6*C, H, W); dist, scale: (1, C, 1, 1)."""
    N, C6, H, W = x_nchw.shape
    C = dist.shape[1]
    assert C6 == 6 * C, f"input channels {C6} != 6 * {C}"

    dt = x_nchw.dtype
    itemsize = jnp.dtype(dt).itemsize

    # --- glue (plain JAX): emulate .repeat(1,6,1,1), flatten, pack scale/dist ---
    scale_c = jnp.tile(scale.reshape(C).astype(dt), (6,))            # (6C,)
    dist_c = jnp.tile(dist.reshape(C).astype(dt), (6,))              # (6C,)
    R = N * C6
    L = H * W
    x2d = x_nchw.reshape(R, L)
    sd = jnp.stack(
        [jnp.broadcast_to(scale_c[None, :], (N, C6)).reshape(R),
         jnp.broadcast_to(dist_c[None, :], (N, C6)).reshape(R)],
        axis=-1)                                                     # (R, 2)

    # --- tile sizing (lane tile multiple of 128, row tile multiple of sublane) ---
    sub = max(8, 8 * (4 // itemsize))          # 8 for f32, 16 for bf16, 32 for i8
    tl = min(lane_tile, _round_up(L, 128))
    tl = max(128, (tl // 128) * 128)
    L_pad = _round_up(L, tl)

    # 2 double-buffered tiles for x + 2 for out = 4 big tiles live at once.
    max_tr = max(sub, (vmem_budget_bytes // (4 * tl * itemsize)) // sub * sub)
    tr_cap = max(sub, (min(row_tile, max_tr) // sub) * sub)
    tr = min(_round_up(R, sub), tr_cap)
    R_pad = _round_up(R, tr)

    if (R_pad, L_pad) != (R, L):
        x2d = jnp.pad(x2d, ((0, R_pad - R), (0, L_pad - L)))
    if R_pad != R:
        sd = jnp.pad(sd, ((0, R_pad - R), (0, 0)))

    grid = (R_pad // tr, L_pad // tl)

    out2d = pl.pallas_call(
        _normalize_kernel,
        out_shape=jax.ShapeDtypeStruct((R_pad, L_pad), dt),
        grid_spec=pltpu.PrefetchScalarGridSpec(
            num_scalar_prefetch=0,
            grid=grid,
            in_specs=[
                pl.BlockSpec((tr, tl), lambda i, j: (i, j)),
                pl.BlockSpec((tr, 2), lambda i, j: (i, 0)),
            ],
            out_specs=pl.BlockSpec((tr, tl), lambda i, j: (i, j)),
        ),
        compiler_params=pltpu.CompilerParams(
            dimension_semantics=("parallel", "parallel"),
        ),
    )(x2d, sd)

    return out2d[:R, :L].reshape(N, C6, H, W)


if __name__ == "__main__":
    key = jax.random.PRNGKey(0)
    k1, k2, k3 = jax.random.split(key, 3)

    N, C, H, W = 2, 3, 16, 16          # buffers have C channels; input has 6*C
    x = jax.random.normal(k1, (N, 6 * C, H, W), dtype=jnp.float32)
    dist = jax.random.normal(k2, (1, C, 1, 1), dtype=jnp.float32)
    scale = jax.random.uniform(k3, (1, C, 1, 1), dtype=jnp.float32) + 0.5

    out = normalize_pallas(x, dist, scale)
    out = jax.block_until_ready(out)

    # reference (pure JAX, mirrors the PyTorch forward exactly)
    dist_r = jnp.tile(dist, (1, 6, 1, 1))
    scale_r = jnp.tile(scale, (1, 6, 1, 1))
    ref = x * scale_r - dist_r

    assert out.shape == x.shape and out.dtype == x.dtype
    assert jnp.allclose(out, ref, atol=1e-6, rtol=1e-6)
    print("KERNEL_OK")
</pallas_src>

<mosaic_0001>
module attributes {stable_mosaic.version = 11 : i64} {
  func.func @_normalize_kernel(%arg0: i32, %arg1: i32, %arg2: memref<40x256xf32, #tpu.memory_space<vmem>>, %arg3: memref<40x2xf32, #tpu.memory_space<vmem>>, %arg4: memref<40x256xf32, #tpu.memory_space<vmem>>) attributes {dimension_semantics = [#tpu.dimension_semantics<parallel>, #tpu.dimension_semantics<parallel>], iteration_bounds = array<i64: 1, 1>, scalar_prefetch = 0 : i64, scratch_operands = 0 : i64, tpu.core_type = #tpu.core_type<tc>, window_params = [{transform_indices = @transform_0, window_bounds = array<i64: 40, 256>}, {transform_indices = @transform_1, window_bounds = array<i64: 40, 2>}, {transform_indices = @transform_2, window_bounds = array<i64: 40, 256>}]} {
    %c0 = arith.constant 0 : index
    %c0_0 = arith.constant 0 : index
    %0 = vector.load %arg3[%c0, %c0_0] : memref<40x2xf32, #tpu.memory_space<vmem>>, vector<40x2xf32>
    %1 = vector.extract_strided_slice %0 {offsets = [0, 0], sizes = [40, 1], strides = [1, 1]} : vector<40x2xf32> to vector<40x1xf32>
    %2 = vector.extract_strided_slice %0 {offsets = [0, 1], sizes = [40, 1], strides = [1, 1]} : vector<40x2xf32> to vector<40x1xf32>
    %c0_1 = arith.constant 0 : index
    %c0_2 = arith.constant 0 : index
    %3 = vector.load %arg2[%c0_1, %c0_2] : memref<40x256xf32, #tpu.memory_space<vmem>>, vector<40x256xf32>
    %4 = vector.broadcast %1 : vector<40x1xf32> to vector<40x256xf32>
    %5 = arith.mulf %3, %4 : vector<40x256xf32>
    %6 = vector.broadcast %2 : vector<40x1xf32> to vector<40x256xf32>
    %7 = arith.subf %5, %6 : vector<40x256xf32>
    %c0_3 = arith.constant 0 : index
    %c0_4 = arith.constant 0 : index
    %8 = vector.load %arg4[%c0_3, %c0_4] : memref<40x256xf32, #tpu.memory_space<vmem>>, vector<40x256xf32>
    tpu.vector_store %arg4[%c0_3, %c0_4], %7 {strides = array<i32>} : memref<40x256xf32, #tpu.memory_space<vmem>>, vector<40x256xf32>,
    return
  }
  func.func @transform_0(%arg0: i32, %arg1: i32) -> (i32, i32) {
    %c0_i32 = arith.constant 0 : i32
    return %arg0, %arg1 : i32, i32
  }
  func.func @transform_1(%arg0: i32, %arg1: i32) -> (i32, i32) {
    %c0_i32 = arith.constant 0 : i32
    %c0_i32_0 = arith.constant 0 : i32
    return %arg0, %c0_i32 : i32, i32
  }
  func.func @transform_2(%arg0: i32, %arg1: i32) -> (i32, i32) {
    %c0_i32 = arith.constant 0 : i32
    return %arg0, %arg1 : i32, i32
  }
}

</mosaic_0001>

<llo_original>
// kernel: tpu_custom_call.1
$region0: #{tpu_custom_call.1}
  #allocation0 [shape = 'u32[]', space=smem, size = 0x4, offset = 0x4, fixed_abs, tag = 'smem constant byte address 0x4 - core index']
  #allocation1 [shape = 'u32[144,128]{1,0:T(1,128)}', space=vmem, size = 0x12000, scoped, tag = 'internal scratch']
  %s0 = inlined_call_operand.hbm [shape: f32[40,256], index: 0, kind: input, shape index: {}]
  %s1 = inlined_call_operand.vmem [shape: f32[40,2], index: 1, kind: input, shape index: {}]
  %s2 = inlined_call_operand.hbm [shape: f32[40,256], index: 2, kind: output, shape index: {}]
  %s3 = sld [smem:[#allocation0]]
  $region22: #{tpu_custom_call.1} parent=0
    _
  %s5 = ssub.s32 1, %s3
  %s6 = scalar_select 0, %s5, %s3
  $region1: #{tpu_custom_call.1} parent=0
    #allocation2 [shape = 'u8[40960]{0}', space=vmem, size = 0xa000, scoped, tag = 'input window, operand 0, single buffered']
    #allocation3 [shape = 's32[1]{0}', space=sflag, size = 0x4, scoped, tag = 'scoped memory for tpu_custom_call.1']
    #allocation4 [shape = 's32[1]{0}', space=sflag, size = 0x4, scoped, tag = 'scoped memory for tpu_custom_call.1']
    #allocation5 [shape = 'u8[40960]{0}', space=vmem, size = 0xa000, scoped, tag = 'output window, operand 0, single buffered']
    %7 = vsyncpa [#allocation3], 0
    %8 = vsyncpa [#allocation4], 0
    // Predicated region
    $region2: #{tpu_custom_call.1} parent=1 // pred_check
      _
    $region3: #{tpu_custom_call.1} parent=1 // pred_check_branch
      %10 = sbr.rel (0) target = $region5
    $region4: #{tpu_custom_call.1} parent=1 // pred_region
      %s12 = ssub.s32 1280, 1280
      %13 = vsyncadd [#allocation3], %s12
      %s14 = sshll.u32 [#allocation2], 4
      %s15 = int_to_ptr.vmem [resolvable:$true] %s14
      %20 = dma.hbm_to_vmem [thread:$0]  %s0, 1280, %s15, [#allocation3], 256, 256, 16
    $region5: #{tpu_custom_call.1} parent=1 // pred_fallthru
      _
    // Predicated region
    $region6: #{tpu_custom_call.1} parent=1 // pred_check
      _
    $region7: #{tpu_custom_call.1} parent=1 // pred_check_branch
      %22 = sbr.rel (0) target = $region9
    $region8: #{tpu_custom_call.1} parent=1 // pred_region
      _
    $region9: #{tpu_custom_call.1} parent=1 // pred_fallthru
      _
    // Predicated region
    $region10: #{tpu_custom_call.1} parent=1 // pred_check
      _
    $region11: #{tpu_custom_call.1} parent=1 // pred_check_branch
      %24 = sbr.rel (0) target = $region13
    $region12: #{tpu_custom_call.1} parent=1 // pred_region
      %25 = dma.done [#allocation3], 1280
    $region13: #{tpu_custom_call.1} parent=1 // pred_fallthru
      _
    %v26 = vld [vmem:[%s1] sm:$0xff]
    %v27 = vld [vmem:[%s1 + $0x8] sm:$0xff]
    %v28 = vld [vmem:[%s1 + $0x10] sm:$0xff]
    %v29 = vld [vmem:[%s1 + $0x18] sm:$0xff]
    %v30 = vld [vmem:[%s1 + $0x20] sm:$0xff]
    %v31 = vld [vmem:[#allocation2] sm:$0xff]
    %v32 = vld [vmem:[#allocation2 + $0x8] sm:$0xff]
    %v33 = vld [vmem:[#allocation2 + $0x10] sm:$0xff]
    %v34 = vld [vmem:[#allocation2 + $0x18] sm:$0xff]
    %v35 = vld [vmem:[#allocation2 + $0x20] sm:$0xff]
    %v36 = vld [vmem:[#allocation2 + $0x28] sm:$0xff]
    %v37 = vld [vmem:[#allocation2 + $0x30] sm:$0xff]
    %v38 = vld [vmem:[#allocation2 + $0x38] sm:$0xff]
    %v39 = vld [vmem:[#allocation2 + $0x40] sm:$0xff]
    %v40 = vld [vmem:[#allocation2 + $0x48] sm:$0xff]
    %42 = vset.pattern.permute.xlu0 0
    %43 = vperm.xlu0 %42, %v26
    %v44 = vpop.permute.xlu0 %43
    %47 = vset.pattern.permute.xlu0 0
    %48 = vperm.xlu0 %47, %v27
    %v49 = vpop.permute.xlu0 %48
    %52 = vset.pattern.permute.xlu0 0
    %53 = vperm.xlu0 %52, %v28
    %v54 = vpop.permute.xlu0 %53
    %57 = vset.pattern.permute.xlu0 0
    %58 = vperm.xlu0 %57, %v29
    %v59 = vpop.permute.xlu0 %58
    %62 = vset.pattern.permute.xlu0 0
    %63 = vperm.xlu0 %62, %v30
    %v64 = vpop.permute.xlu0 %63
    %v66 = vmul.f32 %v31, %v44
    %v67 = vmul.f32 %v32, %v44
    %v68 = vmul.f32 %v33, %v49
    %v69 = vmul.f32 %v34, %v49
    %v70 = vmul.f32 %v35, %v54
    %v71 = vmul.f32 %v36, %v54
    %v72 = vmul.f32 %v37, %v59
    %v73 = vmul.f32 %v38, %v59
    %v74 = vmul.f32 %v39, %v64
    %v75 = vmul.f32 %v40, %v64
    %76 = vset.pattern.permute.xlu0 1
    %77 = vperm.xlu0 %76, %v26
    %v78 = vpop.permute.xlu0 %77
    %80 = vset.pattern.permute.xlu0 1
    %81 = vperm.xlu0 %80, %v27
    %v82 = vpop.permute.xlu0 %81
    %84 = vset.pattern.permute.xlu0 1
    %85 = vperm.xlu0 %84, %v28
    %v86 = vpop.permute.xlu0 %85
    %88 = vset.pattern.permute.xlu0 1
    %89 = vperm.xlu0 %88, %v29
    %v90 = vpop.permute.xlu0 %89
    %92 = vset.pattern.permute.xlu0 1
    %93 = vperm.xlu0 %92, %v30
    %v94 = vpop.permute.xlu0 %93
    %v96 = vsub.f32 %v66, %v78
    %v97 = vsub.f32 %v67, %v78
    %v98 = vsub.f32 %v68, %v82
    %v99 = vsub.f32 %v69, %v82
    %v100 = vsub.f32 %v70, %v86
    %v101 = vsub.f32 %v71, %v86
    %v102 = vsub.f32 %v72, %v90
    %v103 = vsub.f32 %v73, %v90
    %v104 = vsub.f32 %v74, %v94
    %v105 = vsub.f32 %v75, %v94
    %106 = vst [vmem:[#allocation5] sm:$0xff] %v96
    %107 = vst [vmem:[#allocation5 + $0x8] sm:$0xff] %v97
    %108 = vst [vmem:[#allocation5 + $0x10] sm:$0xff] %v98
    %109 = vst [vmem:[#allocation5 + $0x18] sm:$0xff] %v99
    %110 = vst [vmem:[#allocation5 + $0x20] sm:$0xff] %v100
    %111 = vst [vmem:[#allocation5 + $0x28] sm:$0xff] %v101
    %112 = vst [vmem:[#allocation5 + $0x30] sm:$0xff] %v102
    %113 = vst [vmem:[#allocation5 + $0x38] sm:$0xff] %v103
    %114 = vst [vmem:[#allocation5 + $0x40] sm:$0xff] %v104
    %115 = vst [vmem:[#allocation5 + $0x48] sm:$0xff] %v105
    // Predicated region
    $region14: #{tpu_custom_call.1} parent=1 // pred_check
      _
    $region15: #{tpu_custom_call.1} parent=1 // pred_check_branch
      %117 = sbr.rel (0) target = $region17
    $region16: #{tpu_custom_call.1} parent=1 // pred_region
      %s119 = ssub.s32 1280, 1280
      %120 = vsyncadd [#allocation4], %s119
      %s121 = sshll.u32 [#allocation5], 4
      %s122 = int_to_ptr.vmem [resolvable:$true] %s121
      %127 = dma.vmem_to_hbm [thread:$0]  %s122, 1280, %s2, [#allocation4], 256, 256, 16
    $region17: #{tpu_custom_call.1} parent=1 // pred_fallthru
      _
    // Predicated region
    $region18: #{tpu_custom_call.1} parent=1 // pred_check
      _
    $region19: #{tpu_custom_call.1} parent=1 // pred_check_branch
      %129 = sbr.rel (0) target = $region21
    $region20: #{tpu_custom_call.1} parent=1 // pred_region
      %130 = dma.done [#allocation4], 1280
    $region21: #{tpu_custom_call.1} parent=1 // pred_fallthru
      _
    %131 = vsyncpa [#allocation3], 1
    %132 = vsyncpa [#allocation4], 1

</llo_original>
